<compile_context>
chip_gen: v5e
topology: v5e:2x2
jax: 0.10.0
libtpu: 0.0.40
codegen_flags: <defaults>
</compile_context>

<pallas_src>
import functools
import math

import jax
import jax.numpy as jnp
from jax import lax
from jax.experimental import pallas as pl
from jax.experimental.pallas import tpu as pltpu


# ----------------------------- kernels --------------------------------------


def _periodic_matmul_kernel(x_ref, w_ref, b_ref, o_ref):
    """One batch-row tile (MXU expansion path).

    x_ref: (tile_p, G*F)        packed input rows (G batch rows per kernel row)
    w_ref: (G*F, G*F*2K)        resident block-diagonal 2*pi*weight matrix
    b_ref: (1, G*F*2K)          phase offsets: 0 (cos half) / -pi/2 (sin half)
    o_ref: (tile_p, G*F*2K)     lane-dense output slab
    """
    x = x_ref[...].astype(jnp.float32)
    v = jnp.dot(
        x,
        w_ref[...],
        preferred_element_type=jnp.float32,
        precision=lax.Precision.HIGHEST,   # keep f32 accuracy on the MXU
    )
    o_ref[...] = jnp.cos(v + b_ref[...]).astype(o_ref.dtype)


def _periodic_bcast_kernel(x_ref, w_ref, b_ref, o_ref, *, n_cols_in, two_k):
    """Fallback (very large F*K where W_big would not fit a small VMEM budget).

    w_ref: (1, G*F*2K)   2*pi*weight duplicated per feature block: [w_f | w_f]
    """
    x = x_ref[...].astype(jnp.float32)
    tb = x.shape[0]
    pieces = [
        jnp.broadcast_to(x[:, c:c + 1], (tb, two_k)) for c in range(n_cols_in)
    ]
    x_rep = pieces[0] if n_cols_in == 1 else jnp.concatenate(pieces, axis=1)
    v = x_rep * w_ref[...] + b_ref[...]
    o_ref[...] = jnp.cos(v).astype(o_ref.dtype)


# --------------------------- wrapper helpers ---------------------------------


def _cdiv(a, b):
    return -(-a // b)


def _round_up(a, m):
    return _cdiv(a, m) * m


def _min_sublane(dtype):
    return {4: 8, 2: 16, 1: 32}.get(jnp.dtype(dtype).itemsize, 8)


def _vmem_plan():
    """(target output-tile bytes, scoped vmem limit) per TPU generation."""
    vmem_cap = 0
    try:
        info = pltpu.get_tpu_info()
        vmem_cap = int(getattr(info, "vmem_capacity_bytes", 0) or 0)
    except Exception:
        vmem_cap = 0
    if vmem_cap >= 96 * 1024 * 1024:
        # v5e / v6e class (128 MiB VMEM): big tiles amortize pipeline overhead.
        return 6 * 1024 * 1024, 64 * 1024 * 1024
    # v7x class (64 MiB VMEM) or unknown: stay conservative.
    return 4 * 1024 * 1024, 44 * 1024 * 1024


def _choose_lane_pack(b, out_w, target_lanes=512):
    """Batch rows packed per kernel row so the lane width is a multiple of 128
    (>= target_lanes when possible).  Only divisors of b are used so no batch
    pad / output slice is ever needed."""
    r = 128 // math.gcd(out_w, 128)          # minimal G with G*out_w % 128 == 0
    if r * out_w >= target_lanes:
        g_target = r
    else:
        g_target = r * _cdiv(target_lanes, r * out_w)
    cand = g_target
    while cand >= r:
        if cand >= 1 and b % cand == 0:
            return cand
        cand -= r
    # TODO(synk): r does not divide b -> fall back to unpacked (masked, sub-128
    # lane stores) rather than padding the batch and re-copying the output.
    return 1


def _choose_tile_rows(n_rows, row_out_bytes, target_tile_bytes, sublane,
                      min_steps=8):
    """Rows per grid step: big enough to amortize ~0.35us/step pipeline
    overhead, small enough for the VMEM budget, and (when rows permit)
    >= min_steps grid steps with an even step count for v7x's 2 TensorCores."""
    if n_rows <= sublane:
        return n_rows                                   # one (partial) block
    cap = (n_rows // sublane) * sublane                 # never exceed the array
    budget = max(
        sublane,
        (target_tile_bytes // max(row_out_bytes, 1)) // sublane * sublane,
    )
    tile = min(cap, budget)
    per_step = max(sublane, _round_up(_cdiv(n_rows, min_steps), sublane))
    tile = max(sublane, min(tile, per_step))
    steps = _cdiv(n_rows, tile)
    if steps > 1 and steps % 2 == 1:                    # best-effort even steps
        alt = max(sublane, _round_up(_cdiv(n_rows, steps + 1), sublane))
        if alt <= cap and _cdiv(n_rows, alt) % 2 == 0:
            tile = alt
    return tile


# ------------------------------ forward --------------------------------------


def periodic_forward(x, weight, *, out_dtype=None,
                     matmul_weight_budget_bytes=8 * 1024 * 1024):
    """Pallas implementation of _Periodic.forward.

    x:      (..., n_features)
    weight: (n_features, k)
    returns (..., n_features, 2*k), dtype = x.dtype (or out_dtype if given).
    """
    n_features, k = weight.shape
    if x.ndim < 1:
        raise ValueError(
            f"The input must have at least one dimension, however: x.ndim={x.ndim!r}"
        )
    if x.shape[-1] != n_features:
        raise ValueError(
            f"The last dimension of the input was expected to be {n_features}, "
            f"however, x.shape[-1]={x.shape[-1]!r}"
        )

    two_k = 2 * k
    out_w = n_features * two_k
    out_dtype = jnp.dtype(x.dtype if out_dtype is None else out_dtype)

    lead_shape = x.shape[:-1]
    b = 1
    for d in lead_shape:
        b *= d
    if b == 0:
        return jnp.zeros((*lead_shape, n_features, two_k), out_dtype)

    x2d = x.reshape(b, n_features)

    # ---- lane packing: G batch rows per kernel row (pure row-major view) ----
    g = _choose_lane_pack(b, out_w)
    packed_rows = b // g
    cw_in = g * n_features
    cw_out = g * out_w
    x_packed = x2d.reshape(packed_rows, cw_in)

    # ---- resident weight / phase arrays (built once, tiny) ------------------
    w32 = (2.0 * math.pi) * weight.astype(jnp.float32)            # (F, K)
    w_row = jnp.concatenate([w32, w32], axis=-1)                  # (F, 2K) [w|w]
    bias_feat = jnp.concatenate(
        [jnp.zeros((n_features, k), jnp.float32),
         jnp.full((n_features, k), -0.5 * math.pi, jnp.float32)],
        axis=-1,
    )                                                             # (F, 2K)
    bias = jnp.tile(bias_feat.reshape(1, out_w), (1, g))          # (1, CW_out)

    use_matmul = cw_in * cw_out * 4 <= matmul_weight_budget_bytes
    if use_matmul:
        # W_big[gi*F + f, gi*out_w + f*2K + j] = 2*pi*w[f, j % K], zeros elsewhere.
        eye_f = jnp.eye(n_features, dtype=jnp.float32)
        w_feat = (eye_f[:, :, None] * w_row[None, :, :]).reshape(n_features, out_w)
        if g == 1:
            w_arr = w_feat
        else:
            eye_g = jnp.eye(g, dtype=jnp.float32)
            w_arr = (eye_g[:, None, :, None] * w_feat[None, :, None, :]
                     ).reshape(cw_in, cw_out)
        kernel = _periodic_matmul_kernel
        w_spec = pl.BlockSpec((cw_in, cw_out), lambda i: (0, 0))
    else:
        # TODO(synk): for very large F*K the block-diagonal matmul weight would
        # not fit a small VMEM budget; fall back to lane-broadcast expansion.
        kernel = functools.partial(
            _periodic_bcast_kernel, n_cols_in=cw_in, two_k=two_k)
        w_arr = jnp.tile(w_row.reshape(1, out_w), (1, g))         # (1, CW_out)
        w_spec = pl.BlockSpec((1, cw_out), lambda i: (0, 0))

    # ---- per-generation tile / VMEM plan, ragged cdiv grid (no pad/slice) ---
    target_tile_bytes, vmem_limit = _vmem_plan()
    sublane = max(_min_sublane(x.dtype), _min_sublane(out_dtype))
    tile_p = _choose_tile_rows(
        packed_rows, cw_out * out_dtype.itemsize, target_tile_bytes, sublane)
    grid = (_cdiv(packed_rows, tile_p),)

    out2d = pl.pallas_call(
        kernel,
        out_shape=jax.ShapeDtypeStruct((packed_rows, cw_out), out_dtype),
        grid_spec=pltpu.PrefetchScalarGridSpec(
            num_scalar_prefetch=0,
            grid=grid,
            in_specs=[
                # batch-row tile of packed x (last dim == full array width)
                pl.BlockSpec((tile_p, cw_in), lambda i: (i, 0)),
                # small resident weight + phase bias: same block every step
                w_spec,
                pl.BlockSpec((1, cw_out), lambda i: (0, 0)),
            ],
            out_specs=pl.BlockSpec((tile_p, cw_out), lambda i: (i, 0)),
        ),
        compiler_params=pltpu.CompilerParams(
            dimension_semantics=("parallel",),
            vmem_limit_bytes=vmem_limit,
        ),
    )(x_packed, w_arr, bias)

    # (packed_rows, G*F*2K) -> (..., F, 2K): row-major compatible, zero-cost view.
    return out2d.reshape(*lead_shape, n_features, two_k)


def _init_periodic_weight(key, n_features, k, sigma):
    # nn.init.trunc_normal_(weight, 0.0, sigma, a=-3*sigma, b=3*sigma)
    return sigma * jax.random.truncated_normal(
        key, -3.0, 3.0, (n_features, k), dtype=jnp.float32
    )


if __name__ == "__main__":
    key = jax.random.PRNGKey(0)
    k_w, k_x, k_x2, k_x3 = jax.random.split(key, 4)

    n_features = 4
    k = 8
    sigma = 0.1

    weight = _init_periodic_weight(k_w, n_features, k, sigma)

    def ref_fn(xv):
        v = 2.0 * math.pi * weight * xv[..., None]
        return jnp.concatenate([jnp.cos(v), jnp.sin(v)], axis=-1)

    # (2, 8, 4) -> (2, 8, 4, 16): b=16, lane-packed G=8 (512 dense lanes).
    x = jax.random.normal(k_x, (2, 8, n_features), dtype=jnp.float32)
    out = jax.block_until_ready(periodic_forward(x, weight))
    assert out.shape == (2, 8, n_features, 2 * k), out.shape
    assert jnp.allclose(out, ref_fn(x), atol=1e-4, rtol=1e-4)

    # (3, 70, 4): b=210, divisor packing G=6 (384 lanes), multi-step ragged grid.
    x2 = jax.random.normal(k_x2, (3, 70, n_features), dtype=jnp.float32)
    out2 = jax.block_until_ready(periodic_forward(x2, weight))
    assert out2.shape == (3, 70, n_features, 2 * k), out2.shape
    assert jnp.allclose(out2, ref_fn(x2), atol=1e-4, rtol=1e-4)

    # 1-D input exercises the unpacked (G=1) path.
    x3 = jax.random.normal(k_x3, (n_features,), dtype=jnp.float32)
    out3 = jax.block_until_ready(periodic_forward(x3, weight))
    assert out3.shape == (n_features, 2 * k), out3.shape
    assert jnp.allclose(out3, ref_fn(x3), atol=1e-4, rtol=1e-4)

    # Optional bf16 output path (halves HBM writes when downstream tolerates it).
    out_bf16 = jax.block_until_ready(
        periodic_forward(x2, weight, out_dtype=jnp.bfloat16))
    assert out_bf16.dtype == jnp.bfloat16
    assert jnp.allclose(out_bf16.astype(jnp.float32), ref_fn(x2),
                        atol=2e-2, rtol=2e-2)

    print("KERNEL_OK")
</pallas_src>

<mosaic_0001>
module attributes {stable_mosaic.version = 11 : i64} {
  func.func @_periodic_matmul_kernel(%arg0: i32, %arg1: memref<2x32xf32, #tpu.memory_space<vmem>>, %arg2: memref<32x512xf32, #tpu.memory_space<vmem>>, %arg3: memref<1x512xf32, #tpu.memory_space<vmem>>, %arg4: memref<2x512xf32, #tpu.memory_space<vmem>>) attributes {dimension_semantics = [#tpu.dimension_semantics<parallel>], iteration_bounds = array<i64: 1>, scalar_prefetch = 0 : i64, scratch_operands = 0 : i64, tpu.core_type = #tpu.core_type<tc>, window_params = [{transform_indices = @transform_0, window_bounds = array<i64: 2, 32>}, {pipeline_mode = #tpu.pipeline_mode<synchronous>, transform_indices = @transform_1, window_bounds = array<i64: 32, 512>}, {pipeline_mode = #tpu.pipeline_mode<synchronous>, transform_indices = @transform_2, window_bounds = array<i64: 1, 512>}, {transform_indices = @transform_3, window_bounds = array<i64: 2, 512>}]} {
    %c0 = arith.constant 0 : index
    %c0_0 = arith.constant 0 : index
    %0 = vector.load %arg1[%c0, %c0_0] : memref<2x32xf32, #tpu.memory_space<vmem>>, vector<2x32xf32>
    %c0_1 = arith.constant 0 : index
    %c0_2 = arith.constant 0 : index
    %1 = vector.load %arg2[%c0_1, %c0_2] : memref<32x512xf32, #tpu.memory_space<vmem>>, vector<32x512xf32>
    %cst = arith.constant dense<0.000000e+00> : vector<2x512xf32>
    %2 = tpu.matmul %0, %1, %cst {dimension_numbers = #tpu.dot_dimension_numbers<[1], [0], [0], [1], [0, 0, 1, 1], [], []>, precision = #tpu.contract_precision<fp32>} : vector<2x32xf32>, vector<32x512xf32>, vector<2x512xf32> -> vector<2x512xf32>
    %c0_3 = arith.constant 0 : index
    %c0_4 = arith.constant 0 : index
    %3 = vector.load %arg3[%c0_3, %c0_4] : memref<1x512xf32, #tpu.memory_space<vmem>>, vector<1x512xf32>
    %4 = vector.broadcast %3 : vector<1x512xf32> to vector<2x512xf32>
    %5 = arith.addf %2, %4 : vector<2x512xf32>
    %6 = math.cos %5 : vector<2x512xf32>
    %c0_5 = arith.constant 0 : index
    %c0_6 = arith.constant 0 : index
    %7 = vector.load %arg4[%c0_5, %c0_6] : memref<2x512xf32, #tpu.memory_space<vmem>>, vector<2x512xf32>
    tpu.vector_store %arg4[%c0_5, %c0_6], %6 {strides = array<i32>} : memref<2x512xf32, #tpu.memory_space<vmem>>, vector<2x512xf32>,
    return
  }
  func.func @transform_0(%arg0: i32) -> (i32, i32) {
    %c0_i32 = arith.constant 0 : i32
    %c0_i32_0 = arith.constant 0 : i32
    return %arg0, %c0_i32 : i32, i32
  }
  func.func @transform_1(%arg0: i32) -> (i32, i32) {
    %c0_i32 = arith.constant 0 : i32
    %c0_i32_0 = arith.constant 0 : i32
    %c0_i32_1 = arith.constant 0 : i32
    return %c0_i32, %c0_i32_0 : i32, i32
  }
  func.func @transform_2(%arg0: i32) -> (i32, i32) {
    %c0_i32 = arith.constant 0 : i32
    %c0_i32_0 = arith.constant 0 : i32
    %c0_i32_1 = arith.constant 0 : i32
    return %c0_i32, %c0_i32_0 : i32, i32
  }
  func.func @transform_3(%arg0: i32) -> (i32, i32) {
    %c0_i32 = arith.constant 0 : i32
    %c0_i32_0 = arith.constant 0 : i32
    return %arg0, %c0_i32 : i32, i32
  }
}

</mosaic_0001>

<llo_original>
// kernel: tpu_custom_call.1
$region0: #{tpu_custom_call.1}
  #allocation0 [shape = 'u32[]', space=smem, size = 0x4, offset = 0x4, fixed_abs, tag = 'smem constant byte address 0x4 - core index']
  #allocation1 [shape = 'u32[72,128]{1,0:T(1,128)}', space=vmem, size = 0x9000, scoped, tag = 'internal scratch']
  %s0 = inlined_call_operand.hbm [shape: f32[2,32], index: 0, kind: input, shape index: {}]
  %s1 = inlined_call_operand.hbm [shape: f32[32,512], index: 1, kind: input, shape index: {}]
  %s2 = inlined_call_operand.hbm [shape: f32[1,512], index: 2, kind: input, shape index: {}]
  %s3 = inlined_call_operand.hbm [shape: f32[2,512], index: 3, kind: output, shape index: {}]
  %s4 = sld [smem:[#allocation0]]
  $region34: #{tpu_custom_call.1} parent=0
    _
  %s6 = ssub.s32 1, %s4
  %s7 = scalar_select 0, %s6, %s4
  $region1: #{tpu_custom_call.1} parent=0
    #allocation2 [shape = 'u8[1024]{0}', space=vmem, size = 0x400, scoped, tag = 'input window, operand 0, single buffered']
    #allocation3 [shape = 's32[1]{0}', space=sflag, size = 0x4, scoped, tag = 'scoped memory for tpu_custom_call.1']
    #allocation4 [shape = 's32[1]{0}', space=sflag, size = 0x4, scoped, tag = 'scoped memory for tpu_custom_call.1']
    #allocation5 [shape = 'u8[65536]{0}', space=vmem, size = 0x10000, scoped, tag = 'input window, operand 1, single buffered']
    #allocation6 [shape = 's32[1]{0}', space=sflag, size = 0x4, scoped, tag = 'scoped memory for tpu_custom_call.1']
    #allocation7 [shape = 'u8[2048]{0}', space=vmem, size = 0x800, scoped, tag = 'input window, operand 2, single buffered']
    #allocation8 [shape = 'u8[4096]{0}', space=vmem, size = 0x1000, scoped, tag = 'output window, operand 0, single buffered']
    %8 = vsyncpa [#allocation3], 0
    %9 = vsyncpa [#allocation6], 0
    %10 = vsyncpa [#allocation4], 0
    // Predicated region
    $region2: #{tpu_custom_call.1} parent=1 // pred_check
      _
    $region3: #{tpu_custom_call.1} parent=1 // pred_check_branch
      %12 = sbr.rel (0) target = $region5
    $region4: #{tpu_custom_call.1} parent=1 // pred_region
      %14 = vsyncadd [#allocation3], 0
      %s16 = sshll.u32 %s0, 4
      %s17 = int_to_ptr.hbm [resolvable:$true] %s16
      %s18 = sshll.u32 [#allocation2], 4
      %s19 = int_to_ptr.vmem [resolvable:$true] %s18
      %21 = dma.hbm_to_vmem [thread:$0]  %s17, 32, %s19, [#allocation3]
    $region5: #{tpu_custom_call.1} parent=1 // pred_fallthru
      _
    // Predicated region
    $region6: #{tpu_custom_call.1} parent=1 // pred_check
      _
    $region7: #{tpu_custom_call.1} parent=1 // pred_check_branch
      %23 = sbr.rel (0) target = $region9
    $region8: #{tpu_custom_call.1} parent=1 // pred_region
      %25 = vsyncadd [#allocation6], 0
      %s26 = sshll.u32 %s1, 4
      %s27 = int_to_ptr.hbm [resolvable:$true] %s26
      %s28 = sshll.u32 [#allocation5], 4
      %s29 = int_to_ptr.vmem [resolvable:$true] %s28
      %34 = dma.hbm_to_vmem [thread:$0]  %s27, 2048, %s29, [#allocation6], 512, 512, 32
    $region9: #{tpu_custom_call.1} parent=1 // pred_fallthru
      _
    // Predicated region
    $region10: #{tpu_custom_call.1} parent=1 // pred_check
      _
    $region11: #{tpu_custom_call.1} parent=1 // pred_check_branch
      %36 = sbr.rel (0) target = $region13
    $region12: #{tpu_custom_call.1} parent=1 // pred_region
      %38 = vsyncadd [#allocation6], 0
      %s40 = sshll.u32 %s2, 4
      %s41 = int_to_ptr.hbm [resolvable:$true] %s40
      %s42 = sshll.u32 [#allocation7], 4
      %s43 = int_to_ptr.vmem [resolvable:$true] %s42
      %45 = dma.hbm_to_vmem [thread:$0]  %s41, 64, %s43, [#allocation6]
    $region13: #{tpu_custom_call.1} parent=1 // pred_fallthru
      _
    // Predicated region
    $region14: #{tpu_custom_call.1} parent=1 // pred_check
      _
    $region15: #{tpu_custom_call.1} parent=1 // pred_check_branch
      %47 = sbr.rel (0) target = $region17
    $region16: #{tpu_custom_call.1} parent=1 // pred_region
      %49 = dma.done [#allocation3], 32
    $region17: #{tpu_custom_call.1} parent=1 // pred_fallthru
      _
    // Predicated region
    $region18: #{tpu_custom_call.1} parent=1 // pred_check
      _
    $region19: #{tpu_custom_call.1} parent=1 // pred_check_branch
      %51 = sbr.rel (0) target = $region21
    $region20: #{tpu_custom_call.1} parent=1 // pred_region
      %53 = dma.done [#allocation6], 2048
    $region21: #{tpu_custom_call.1} parent=1 // pred_fallthru
      _
    // Predicated region
    $region22: #{tpu_custom_call.1} parent=1 // pred_check
      _
    $region23: #{tpu_custom_call.1} parent=1 // pred_check_branch
      %55 = sbr.rel (0) target = $region25
    $region24: #{tpu_custom_call.1} parent=1 // pred_region
      %57 = dma.done [#allocation6], 64
    $region25: #{tpu_custom_call.1} parent=1 // pred_fallthru
      _
    %v58 = vld [vmem:[#allocation2] sm:$0x3]
    %v59 = vld [vmem:[#allocation5] sm:$0xff]
    %v60 = vld [vmem:[#allocation5 + $0x8] sm:$0xff]
    %v61 = vld [vmem:[#allocation5 + $0x10] sm:$0xff]
    %v62 = vld [vmem:[#allocation5 + $0x18] sm:$0xff]
    %v63 = vld [vmem:[#allocation5 + $0x20] sm:$0xff]
    %v64 = vld [vmem:[#allocation5 + $0x28] sm:$0xff]
    %v65 = vld [vmem:[#allocation5 + $0x30] sm:$0xff]
    %v66 = vld [vmem:[#allocation5 + $0x38] sm:$0xff]
    %v67 = vld [vmem:[#allocation5 + $0x40] sm:$0xff]
    %v68 = vld [vmem:[#allocation5 + $0x48] sm:$0xff]
    %v69 = vld [vmem:[#allocation5 + $0x50] sm:$0xff]
    %v70 = vld [vmem:[#allocation5 + $0x58] sm:$0xff]
    %v71 = vld [vmem:[#allocation5 + $0x60] sm:$0xff]
    %v72 = vld [vmem:[#allocation5 + $0x68] sm:$0xff]
    %v73 = vld [vmem:[#allocation5 + $0x70] sm:$0xff]
    %v74 = vld [vmem:[#allocation5 + $0x78] sm:$0xff]
    %v75 = vld [vmem:[#allocation7] sm:$0xf]
    %v77 = vperm.slane %v75, 0
    %v78 = vperm.slane %v75, 1
    %v79 = vperm.slane %v75, 2
    %v80 = vperm.slane %v75, 3
    %vm85 = vcmask 261120
    %v87 = vsel %vm85, %v58, 0
    %89 = vmatpush.msra.mxu0 0.0
    %90 = vmatpush.msra.mxu0 0.0
    %91 = vmatpush.msra.mxu0 0.0
    %92 = vmatpush.msra.mxu0 0.0
    %93 = vmatpush.msra.mxu0 0.0
    %94 = vmatpush.msra.mxu0 0.0
    %95 = vmatpush.msra.mxu0 0.0
    %96 = vmatpush.msra.mxu0 0.0
    %97 = vmatpush.msra.mxu0 0.0
    %98 = vmatpush.msra.mxu0 0.0
    %99 = vmatpush.msra.mxu0 0.0
    %100 = vmatpush.msra.mxu0 0.0
    %v101 = vand.u32 %v71, 4294901760
    %102 = vmatpush.msra.mxu0 %v101
    %v103 = vand.u32 %v67, 4294901760
    %104 = vmatpush.msra.mxu0 %v103
    %v105 = vand.u32 %v63, 4294901760
    %106 = vmatpush.msra.mxu0 %v105
    %v107 = vand.u32 %v59, 4294901760
    %108 = vmatpush.msra.mxu0 %v107
    %v109 = vand.u32 %v87, 4294901760
    %v110 = vsub.f32 %v87, %v109
    %v111 = vand.u32 %v110, 4294901760
    %v112 = vsub.f32 %v110, %v111
    %v113 = vand.u32 %v112, 4294901760
    %114 = vmatmul.f32.gmra.mxu0 %v113
    %v115 = vpop.f32.mrf.mxu0
    %v116 = vadd.f32 %v77, %v115
    %117 = vdwg.mxu0
    %118 = vmatpush.msra.mxu0 0.0
    %119 = vmatpush.msra.mxu0 0.0
    %120 = vmatpush.msra.mxu0 0.0
    %121 = vmatpush.msra.mxu0 0.0
    %122 = vmatpush.msra.mxu0 0.0
    %123 = vmatpush.msra.mxu0 0.0
    %124 = vmatpush.msra.mxu0 0.0
    %125 = vmatpush.msra.mxu0 0.0
    %126 = vmatpush.msra.mxu0 0.0
    %127 = vmatpush.msra.mxu0 0.0
    %128 = vmatpush.msra.mxu0 0.0
    %129 = vmatpush.msra.mxu0 0.0
    %v130 = vand.u32 %v71, 4294901760
    %v131 = vsub.f32 %v71, %v130
    %v132 = vand.u32 %v131, 4294901760
    %v133 = vsub.f32 %v131, %v132
    %v134 = vand.u32 %v133, 4294901760
    %135 = vmatpush.msra.mxu0 %v134
    %v136 = vand.u32 %v67, 4294901760
    %v137 = vsub.f32 %v67, %v136
    %v138 = vand.u32 %v137, 4294901760
    %v139 = vsub.f32 %v137, %v138
    %v140 = vand.u32 %v139, 4294901760
    %141 = vmatpush.msra.mxu0 %v140
    %v142 = vand.u32 %v63, 4294901760
    %v143 = vsub.f32 %v63, %v142
    %v144 = vand.u32 %v143, 4294901760
    %v145 = vsub.f32 %v143, %v144
    %v146 = vand.u32 %v145, 4294901760
    %147 = vmatpush.msra.mxu0 %v146
    %v148 = vand.u32 %v59, 4294901760
    %v149 = vsub.f32 %v59, %v148
    %v150 = vand.u32 %v149, 4294901760
    %v151 = vsub.f32 %v149, %v150
    %v152 = vand.u32 %v151, 4294901760
    %153 = vmatpush.msra.mxu0 %v152
    %v154 = vand.u32 %v87, 4294901760
    %155 = vmatmul.f32.gmra.mxu0 %v154
    %v156 = vpop.f32.mrf.mxu0
    %v157 = vadd.f32 %v116, %v156
    %158 = vdwg.mxu0
    %159 = vmatpush.msra.mxu0 0.0
    %160 = vmatpush.msra.mxu0 0.0
    %161 = vmatpush.msra.mxu0 0.0
    %162 = vmatpush.msra.mxu0 0.0
    %163 = vmatpush.msra.mxu0 0.0
    %164 = vmatpush.msra.mxu0 0.0
    %165 = vmatpush.msra.mxu0 0.0
    %166 = vmatpush.msra.mxu0 0.0
    %167 = vmatpush.msra.mxu0 0.0
    %168 = vmatpush.msra.mxu0 0.0
    %169 = vmatpush.msra.mxu0 0.0
    %170 = vmatpush.msra.mxu0 0.0
    %v171 = vand.u32 %v71, 4294901760
    %v172 = vsub.f32 %v71, %v171
    %173 = vmatpush.msra.mxu0 %v172
    %v174 = vand.u32 %v67, 4294901760
    %v175 = vsub.f32 %v67, %v174
    %176 = vmatpush.msra.mxu0 %v175
    %v177 = vand.u32 %v63, 4294901760
    %v178 = vsub.f32 %v63, %v177
    %179 = vmatpush.msra.mxu0 %v178
    %v180 = vand.u32 %v59, 4294901760
    %v181 = vsub.f32 %v59, %v180
    %182 = vmatpush.msra.mxu0 %v181
    %v183 = vand.u32 %v87, 4294901760
    %v184 = vsub.f32 %v87, %v183
    %185 = vmatmul.f32.gmra.mxu0 %v184
    %v186 = vpop.f32.mrf.mxu0
    %v187 = vadd.f32 %v157, %v186
    %188 = vdwg.mxu0
    %189 = vmatpush.msra.mxu0 0.0
    %190 = vmatpush.msra.mxu0 0.0
    %191 = vmatpush.msra.mxu0 0.0
    %192 = vmatpush.msra.mxu0 0.0
    %193 = vmatpush.msra.mxu0 0.0
    %194 = vmatpush.msra.mxu0 0.0
    %195 = vmatpush.msra.mxu0 0.0
    %196 = vmatpush.msra.mxu0 0.0
    %197 = vmatpush.msra.mxu0 0.0
    %198 = vmatpush.msra.mxu0 0.0
    %199 = vmatpush.msra.mxu0 0.0
    %200 = vmatpush.msra.mxu0 0.0
    %v201 = vand.u32 %v71, 4294901760
    %202 = vmatpush.msra.mxu0 %v201
    %v203 = vand.u32 %v67, 4294901760
    %204 = vmatpush.msra.mxu0 %v203
    %v205 = vand.u32 %v63, 4294901760
    %206 = vmatpush.msra.mxu0 %v205
    %v207 = vand.u32 %v59, 4294901760
    %208 = vmatpush.msra.mxu0 %v207
    %v209 = vand.u32 %v87, 4294901760
    %v210 = vsub.f32 %v87, %v209
    %v211 = vand.u32 %v210, 4294901760
    %212 = vmatmul.f32.gmra.mxu0 %v211
    %v213 = vpop.f32.mrf.mxu0
    %v214 = vadd.f32 %v187, %v213
    %215 = vdwg.mxu0
    %216 = vmatpush.msra.mxu0 0.0
    %217 = vmatpush.msra.mxu0 0.0
    %218 = vmatpush.msra.mxu0 0.0
    %219 = vmatpush.msra.mxu0 0.0
    %220 = vmatpush.msra.mxu0 0.0
    %221 = vmatpush.msra.mxu0 0.0
    %222 = vmatpush.msra.mxu0 0.0
    %223 = vmatpush.msra.mxu0 0.0
    %224 = vmatpush.msra.mxu0 0.0
    %225 = vmatpush.msra.mxu0 0.0
    %226 = vmatpush.msra.mxu0 0.0
    %227 = vmatpush.msra.mxu0 0.0
    %v228 = vand.u32 %v71, 4294901760
    %v229 = vsub.f32 %v71, %v228
    %v230 = vand.u32 %v229, 4294901760
    %231 = vmatpush.msra.mxu0 %v230
    %v232 = vand.u32 %v67, 4294901760
    %v233 = vsub.f32 %v67, %v232
    %v234 = vand.u32 %v233, 4294901760
    %235 = vmatpush.msra.mxu0 %v234
    %v236 = vand.u32 %v63, 4294901760
    %v237 = vsub.f32 %v63, %v236
    %v238 = vand.u32 %v237, 4294901760
    %239 = vmatpush.msra.mxu0 %v238
    %v240 = vand.u32 %v59, 4294901760
    %v241 = vsub.f32 %v59, %v240
    %v242 = vand.u32 %v241, 4294901760
    %243 = vmatpush.msra.mxu0 %v242
    %v244 = vand.u32 %v87, 4294901760
    %245 = vmatmul.f32.gmra.mxu0 %v244
    %v246 = vpop.f32.mrf.mxu0
    %v247 = vadd.f32 %v214, %v246
    %248 = vdwg.mxu0
    %249 = vmatpush.msra.mxu0 0.0
    %250 = vmatpush.msra.mxu0 0.0
    %251 = vmatpush.msra.mxu0 0.0
    %252 = vmatpush.msra.mxu0 0.0
    %253 = vmatpush.msra.mxu0 0.0
    %254 = vmatpush.msra.mxu0 0.0
    %255 = vmatpush.msra.mxu0 0.0
    %256 = vmatpush.msra.mxu0 0.0
    %257 = vmatpush.msra.mxu0 0.0
    %258 = vmatpush.msra.mxu0 0.0
    %259 = vmatpush.msra.mxu0 0.0
    %260 = vmatpush.msra.mxu0 0.0
    %v261 = vand.u32 %v71, 4294901760
    %262 = vmatpush.msra.mxu0 %v261
    %v263 = vand.u32 %v67, 4294901760
    %264 = vmatpush.msra.mxu0 %v263
    %v265 = vand.u32 %v63, 4294901760
    %266 = vmatpush.msra.mxu0 %v265
    %v267 = vand.u32 %v59, 4294901760
    %268 = vmatpush.msra.mxu0 %v267
    %v269 = vand.u32 %v87, 4294901760
    %270 = vmatmul.f32.gmra.mxu0 %v269
    %v271 = vpop.f32.mrf.mxu0
    %v272 = vadd.f32 %v247, %v271
    %273 = vdwg.mxu0
    %274 = vmatpush.msra.mxu0 0.0
    %275 = vmatpush.msra.mxu0 0.0
    %276 = vmatpush.msra.mxu0 0.0
    %277 = vmatpush.msra.mxu0 0.0
    %278 = vmatpush.msra.mxu0 0.0
    %279 = vmatpush.msra.mxu0 0.0
    %280 = vmatpush.msra.mxu0 0.0
    %281 = vmatpush.msra.mxu0 0.0
    %282 = vmatpush.msra.mxu0 0.0
    %283 = vmatpush.msra.mxu0 0.0
    %284 = vmatpush.msra.mxu0 0.0
    %285 = vmatpush.msra.mxu0 0.0
    %v286 = vand.u32 %v72, 4294901760
    %287 = vmatpush.msra.mxu0 %v286
    %v288 = vand.u32 %v68, 4294901760
    %289 = vmatpush.msra.mxu0 %v288
    %v290 = vand.u32 %v64, 4294901760
    %291 = vmatpush.msra.mxu0 %v290
    %v292 = vand.u32 %v60, 4294901760
    %293 = vmatpush.msra.mxu0 %v292
    %v294 = vand.u32 %v87, 4294901760
    %v295 = vsub.f32 %v87, %v294
    %v296 = vand.u32 %v295, 4294901760
    %v297 = vsub.f32 %v295, %v296
    %v298 = vand.u32 %v297, 4294901760
    %299 = vmatmul.f32.gmra.mxu0 %v298
    %v300 = vpop.f32.mrf.mxu0
    %v301 = vadd.f32 %v78, %v300
    %302 = vdwg.mxu0
    %303 = vmatpush.msra.mxu0 0.0
    %304 = vmatpush.msra.mxu0 0.0
    %305 = vmatpush.msra.mxu0 0.0
    %306 = vmatpush.msra.mxu0 0.0
    %307 = vmatpush.msra.mxu0 0.0
    %308 = vmatpush.msra.mxu0 0.0
    %309 = vmatpush.msra.mxu0 0.0
    %310 = vmatpush.msra.mxu0 0.0
    %311 = vmatpush.msra.mxu0 0.0
    %312 = vmatpush.msra.mxu0 0.0
    %313 = vmatpush.msra.mxu0 0.0
    %314 = vmatpush.msra.mxu0 0.0
    %v315 = vand.u32 %v72, 4294901760
    %v316 = vsub.f32 %v72, %v315
    %v317 = vand.u32 %v316, 4294901760
    %v318 = vsub.f32 %v316, %v317
    %v319 = vand.u32 %v318, 4294901760
    %320 = vmatpush.msra.mxu0 %v319
    %v321 = vand.u32 %v68, 4294901760
    %v322 = vsub.f32 %v68, %v321
    %v323 = vand.u32 %v322, 4294901760
    %v324 = vsub.f32 %v322, %v323
    %v325 = vand.u32 %v324, 4294901760
    %326 = vmatpush.msra.mxu0 %v325
    %v327 = vand.u32 %v64, 4294901760
    %v328 = vsub.f32 %v64, %v327
    %v329 = vand.u32 %v328, 4294901760
    %v330 = vsub.f32 %v328, %v329
    %v331 = vand.u32 %v330, 4294901760
    %332 = vmatpush.msra.mxu0 %v331
    %v333 = vand.u32 %v60, 4294901760
    %v334 = vsub.f32 %v60, %v333
    %v335 = vand.u32 %v334, 4294901760
    %v336 = vsub.f32 %v334, %v335
    %v337 = vand.u32 %v336, 4294901760
    %338 = vmatpush.msra.mxu0 %v337
    %v339 = vand.u32 %v87, 4294901760
    %340 = vmatmul.f32.gmra.mxu0 %v339
    %v341 = vpop.f32.mrf.mxu0
    %v342 = vadd.f32 %v301, %v341
    %343 = vdwg.mxu0
    %344 = vmatpush.msra.mxu0 0.0
    %345 = vmatpush.msra.mxu0 0.0
    %346 = vmatpush.msra.mxu0 0.0
    %347 = vmatpush.msra.mxu0 0.0
    %348 = vmatpush.msra.mxu0 0.0
    %349 = vmatpush.msra.mxu0 0.0
    %350 = vmatpush.msra.mxu0 0.0
    %351 = vmatpush.msra.mxu0 0.0
    %352 = vmatpush.msra.mxu0 0.0
    %353 = vmatpush.msra.mxu0 0.0
    %354 = vmatpush.msra.mxu0 0.0
    %355 = vmatpush.msra.mxu0 0.0
    %v356 = vand.u32 %v72, 4294901760
    %v357 = vsub.f32 %v72, %v356
    %358 = vmatpush.msra.mxu0 %v357
    %v359 = vand.u32 %v68, 4294901760
    %v360 = vsub.f32 %v68, %v359
    %361 = vmatpush.msra.mxu0 %v360
    %v362 = vand.u32 %v64, 4294901760
    %v363 = vsub.f32 %v64, %v362
    %364 = vmatpush.msra.mxu0 %v363
    %v365 = vand.u32 %v60, 4294901760
    %v366 = vsub.f32 %v60, %v365
    %367 = vmatpush.msra.mxu0 %v366
    %v368 = vand.u32 %v87, 4294901760
    %v369 = vsub.f32 %v87, %v368
    %370 = vmatmul.f32.gmra.mxu0 %v369
    %v371 = vpop.f32.mrf.mxu0
    %v372 = vadd.f32 %v342, %v371
    %373 = vdwg.mxu0
    %374 = vmatpush.msra.mxu0 0.0
    %375 = vmatpush.msra.mxu0 0.0
    %376 = vmatpush.msra.mxu0 0.0
    %377 = vmatpush.msra.mxu0 0.0
    %378 = vmatpush.msra.mxu0 0.0
    %379 = vmatpush.msra.mxu0 0.0
    %380 = vmatpush.msra.mxu0 0.0
    %381 = vmatpush.msra.mxu0 0.0
    %382 = vmatpush.msra.mxu0 0.0
    %383 = vmatpush.msra.mxu0 0.0
    %384 = vmatpush.msra.mxu0 0.0
    %385 = vmatpush.msra.mxu0 0.0
    %v386 = vand.u32 %v72, 4294901760
    %387 = vmatpush.msra.mxu0 %v386
    %v388 = vand.u32 %v68, 4294901760
    %389 = vmatpush.msra.mxu0 %v388
    %v390 = vand.u32 %v64, 4294901760
    %391 = vmatpush.msra.mxu0 %v390
    %v392 = vand.u32 %v60, 4294901760
    %393 = vmatpush.msra.mxu0 %v392
    %v394 = vand.u32 %v87, 4294901760
    %v395 = vsub.f32 %v87, %v394
    %v396 = vand.u32 %v395, 4294901760
    %397 = vmatmul.f32.gmra.mxu0 %v396
    %v398 = vpop.f32.mrf.mxu0
    %v399 = vadd.f32 %v372, %v398
    %400 = vdwg.mxu0
    %401 = vmatpush.msra.mxu0 0.0
    %402 = vmatpush.msra.mxu0 0.0
    %403 = vmatpush.msra.mxu0 0.0
    %404 = vmatpush.msra.mxu0 0.0
    %405 = vmatpush.msra.mxu0 0.0
    %406 = vmatpush.msra.mxu0 0.0
    %407 = vmatpush.msra.mxu0 0.0
    %408 = vmatpush.msra.mxu0 0.0
    %409 = vmatpush.msra.mxu0 0.0
    %410 = vmatpush.msra.mxu0 0.0
    %411 = vmatpush.msra.mxu0 0.0
    %412 = vmatpush.msra.mxu0 0.0
    %v413 = vand.u32 %v72, 4294901760
    %v414 = vsub.f32 %v72, %v413
    %v415 = vand.u32 %v414, 4294901760
    %416 = vmatpush.msra.mxu0 %v415
    %v417 = vand.u32 %v68, 4294901760
    %v418 = vsub.f32 %v68, %v417
    %v419 = vand.u32 %v418, 4294901760
    %420 = vmatpush.msra.mxu0 %v419
    %v421 = vand.u32 %v64, 4294901760
    %v422 = vsub.f32 %v64, %v421
    %v423 = vand.u32 %v422, 4294901760
    %424 = vmatpush.msra.mxu0 %v423
    %v425 = vand.u32 %v60, 4294901760
    %v426 = vsub.f32 %v60, %v425
    %v427 = vand.u32 %v426, 4294901760
    %428 = vmatpush.msra.mxu0 %v427
    %v429 = vand.u32 %v87, 4294901760
    %430 = vmatmul.f32.gmra.mxu0 %v429
    %v431 = vpop.f32.mrf.mxu0
    %v432 = vadd.f32 %v399, %v431
    %433 = vdwg.mxu0
    %434 = vmatpush.msra.mxu0 0.0
    %435 = vmatpush.msra.mxu0 0.0
    %436 = vmatpush.msra.mxu0 0.0
    %437 = vmatpush.msra.mxu0 0.0
    %438 = vmatpush.msra.mxu0 0.0
    %439 = vmatpush.msra.mxu0 0.0
    %440 = vmatpush.msra.mxu0 0.0
    %441 = vmatpush.msra.mxu0 0.0
    %442 = vmatpush.msra.mxu0 0.0
    %443 = vmatpush.msra.mxu0 0.0
    %444 = vmatpush.msra.mxu0 0.0
    %445 = vmatpush.msra.mxu0 0.0
    %v446 = vand.u32 %v72, 4294901760
    %447 = vmatpush.msra.mxu0 %v446
    %v448 = vand.u32 %v68, 4294901760
    %449 = vmatpush.msra.mxu0 %v448
    %v450 = vand.u32 %v64, 4294901760
    %451 = vmatpush.msra.mxu0 %v450
    %v452 = vand.u32 %v60, 4294901760
    %453 = vmatpush.msra.mxu0 %v452
    %v454 = vand.u32 %v87, 4294901760
    %455 = vmatmul.f32.gmra.mxu0 %v454
    %v456 = vpop.f32.mrf.mxu0
    %v457 = vadd.f32 %v432, %v456
    %458 = vdwg.mxu0
    %459 = vmatpush.msra.mxu0 0.0
    %460 = vmatpush.msra.mxu0 0.0
    %461 = vmatpush.msra.mxu0 0.0
    %462 = vmatpush.msra.mxu0 0.0
    %463 = vmatpush.msra.mxu0 0.0
    %464 = vmatpush.msra.mxu0 0.0
    %465 = vmatpush.msra.mxu0 0.0
    %466 = vmatpush.msra.mxu0 0.0
    %467 = vmatpush.msra.mxu0 0.0
    %468 = vmatpush.msra.mxu0 0.0
    %469 = vmatpush.msra.mxu0 0.0
    %470 = vmatpush.msra.mxu0 0.0
    %v471 = vand.u32 %v73, 4294901760
    %472 = vmatpush.msra.mxu0 %v471
    %v473 = vand.u32 %v69, 4294901760
    %474 = vmatpush.msra.mxu0 %v473
    %v475 = vand.u32 %v65, 4294901760
    %476 = vmatpush.msra.mxu0 %v475
    %v477 = vand.u32 %v61, 4294901760
    %478 = vmatpush.msra.mxu0 %v477
    %v479 = vand.u32 %v87, 4294901760
    %v480 = vsub.f32 %v87, %v479
    %v481 = vand.u32 %v480, 4294901760
    %v482 = vsub.f32 %v480, %v481
    %v483 = vand.u32 %v482, 4294901760
    %484 = vmatmul.f32.gmra.mxu0 %v483
    %v485 = vpop.f32.mrf.mxu0
    %v486 = vadd.f32 %v79, %v485
    %487 = vdwg.mxu0
    %488 = vmatpush.msra.mxu0 0.0
    %489 = vmatpush.msra.mxu0 0.0
    %490 = vmatpush.msra.mxu0 0.0
    %491 = vmatpush.msra.mxu0 0.0
    %492 = vmatpush.msra.mxu0 0.0
    %493 = vmatpush.msra.mxu0 0.0
    %494 = vmatpush.msra.mxu0 0.0
    %495 = vmatpush.msra.mxu0 0.0
    %496 = vmatpush.msra.mxu0 0.0
    %497 = vmatpush.msra.mxu0 0.0
    %498 = vmatpush.msra.mxu0 0.0
    %499 = vmatpush.msra.mxu0 0.0
    %v500 = vand.u32 %v73, 4294901760
    %v501 = vsub.f32 %v73, %v500
    %v502 = vand.u32 %v501, 4294901760
    %v503 = vsub.f32 %v501, %v502
    %v504 = vand.u32 %v503, 4294901760
    %505 = vmatpush.msra.mxu0 %v504
    %v506 = vand.u32 %v69, 4294901760
    %v507 = vsub.f32 %v69, %v506
    %v508 = vand.u32 %v507, 4294901760
    %v509 = vsub.f32 %v507, %v508
    %v510 = vand.u32 %v509, 4294901760
    %511 = vmatpush.msra.mxu0 %v510
    %v512 = vand.u32 %v65, 4294901760
    %v513 = vsub.f32 %v65, %v512
    %v514 = vand.u32 %v513, 4294901760
    %v515 = vsub.f32 %v513, %v514
    %v516 = vand.u32 %v515, 4294901760
    %517 = vmatpush.msra.mxu0 %v516
    %v518 = vand.u32 %v61, 4294901760
    %v519 = vsub.f32 %v61, %v518
    %v520 = vand.u32 %v519, 4294901760
    %v521 = vsub.f32 %v519, %v520
    %v522 = vand.u32 %v521, 4294901760
    %523 = vmatpush.msra.mxu0 %v522
    %v524 = vand.u32 %v87, 4294901760
    %525 = vmatmul.f32.gmra.mxu0 %v524
    %v526 = vpop.f32.mrf.mxu0
    %v527 = vadd.f32 %v486, %v526
    %528 = vdwg.mxu0
    %529 = vmatpush.msra.mxu0 0.0
    %530 = vmatpush.msra.mxu0 0.0
    %531 = vmatpush.msra.mxu0 0.0
    %532 = vmatpush.msra.mxu0 0.0
    %533 = vmatpush.msra.mxu0 0.0
    %534 = vmatpush.msra.mxu0 0.0
    %535 = vmatpush.msra.mxu0 0.0
    %536 = vmatpush.msra.mxu0 0.0
    %537 = vmatpush.msra.mxu0 0.0
    %538 = vmatpush.msra.mxu0 0.0
    %539 = vmatpush.msra.mxu0 0.0
    %540 = vmatpush.msra.mxu0 0.0
    %v541 = vand.u32 %v73, 4294901760
    %v542 = vsub.f32 %v73, %v541
    %543 = vmatpush.msra.mxu0 %v542
    %v544 = vand.u32 %v69, 4294901760
    %v545 = vsub.f32 %v69, %v544
    %546 = vmatpush.msra.mxu0 %v545
    %v547 = vand.u32 %v65, 4294901760
    %v548 = vsub.f32 %v65, %v547
    %549 = vmatpush.msra.mxu0 %v548
    %v550 = vand.u32 %v61, 4294901760
    %v551 = vsub.f32 %v61, %v550
    %552 = vmatpush.msra.mxu0 %v551
    %v553 = vand.u32 %v87, 4294901760
    %v554 = vsub.f32 %v87, %v553
    %555 = vmatmul.f32.gmra.mxu0 %v554
    %v556 = vpop.f32.mrf.mxu0
    %v557 = vadd.f32 %v527, %v556
    %558 = vdwg.mxu0
    %559 = vmatpush.msra.mxu0 0.0
    %560 = vmatpush.msra.mxu0 0.0
    %561 = vmatpush.msra.mxu0 0.0
    %562 = vmatpush.msra.mxu0 0.0
    %563 = vmatpush.msra.mxu0 0.0
    %564 = vmatpush.msra.mxu0 0.0
    %565 = vmatpush.msra.mxu0 0.0
    %566 = vmatpush.msra.mxu0 0.0
    %567 = vmatpush.msra.mxu0 0.0
    %568 = vmatpush.msra.mxu0 0.0
    %569 = vmatpush.msra.mxu0 0.0
    %570 = vmatpush.msra.mxu0 0.0
    %v571 = vand.u32 %v73, 4294901760
    %572 = vmatpush.msra.mxu0 %v571
    %v573 = vand.u32 %v69, 4294901760
    %574 = vmatpush.msra.mxu0 %v573
    %v575 = vand.u32 %v65, 4294901760
    %576 = vmatpush.msra.mxu0 %v575
    %v577 = vand.u32 %v61, 4294901760
    %578 = vmatpush.msra.mxu0 %v577
    %v579 = vand.u32 %v87, 4294901760
    %v580 = vsub.f32 %v87, %v579
    %v581 = vand.u32 %v580, 4294901760
    %582 = vmatmul.f32.gmra.mxu0 %v581
    %v583 = vpop.f32.mrf.mxu0
    %v584 = vadd.f32 %v557, %v583
    %585 = vdwg.mxu0
    %586 = vmatpush.msra.mxu0 0.0
    %587 = vmatpush.msra.mxu0 0.0
    %588 = vmatpush.msra.mxu0 0.0
    %589 = vmatpush.msra.mxu0 0.0
    %590 = vmatpush.msra.mxu0 0.0
    %591 = vmatpush.msra.mxu0 0.0
    %592 = vmatpush.msra.mxu0 0.0
    %593 = vmatpush.msra.mxu0 0.0
    %594 = vmatpush.msra.mxu0 0.0
    %595 = vmatpush.msra.mxu0 0.0
    %596 = vmatpush.msra.mxu0 0.0
    %597 = vmatpush.msra.mxu0 0.0
    %v598 = vand.u32 %v73, 4294901760
    %v599 = vsub.f32 %v73, %v598
    %v600 = vand.u32 %v599, 4294901760
    %601 = vmatpush.msra.mxu0 %v600
    %v602 = vand.u32 %v69, 4294901760
    %v603 = vsub.f32 %v69, %v602
    %v604 = vand.u32 %v603, 4294901760
    %605 = vmatpush.msra.mxu0 %v604
    %v606 = vand.u32 %v65, 4294901760
    %v607 = vsub.f32 %v65, %v606
    %v608 = vand.u32 %v607, 4294901760
    %609 = vmatpush.msra.mxu0 %v608
    %v610 = vand.u32 %v61, 4294901760
    %v611 = vsub.f32 %v61, %v610
    %v612 = vand.u32 %v611, 4294901760
    %613 = vmatpush.msra.mxu0 %v612
    %v614 = vand.u32 %v87, 4294901760
    %615 = vmatmul.f32.gmra.mxu0 %v614
    %v616 = vpop.f32.mrf.mxu0
    %v617 = vadd.f32 %v584, %v616
    %618 = vdwg.mxu0
    %619 = vmatpush.msra.mxu0 0.0
    %620 = vmatpush.msra.mxu0 0.0
    %621 = vmatpush.msra.mxu0 0.0
    %622 = vmatpush.msra.mxu0 0.0
    %623 = vmatpush.msra.mxu0 0.0
    %624 = vmatpush.msra.mxu0 0.0
    %625 = vmatpush.msra.mxu0 0.0
    %626 = vmatpush.msra.mxu0 0.0
    %627 = vmatpush.msra.mxu0 0.0
    %628 = vmatpush.msra.mxu0 0.0
    %629 = vmatpush.msra.mxu0 0.0
    %630 = vmatpush.msra.mxu0 0.0
    %v631 = vand.u32 %v73, 4294901760
    %632 = vmatpush.msra.mxu0 %v631
    %v633 = vand.u32 %v69, 4294901760
    %634 = vmatpush.msra.mxu0 %v633
    %v635 = vand.u32 %v65, 4294901760
    %636 = vmatpush.msra.mxu0 %v635
    %v637 = vand.u32 %v61, 4294901760
    %638 = vmatpush.msra.mxu0 %v637
    %v639 = vand.u32 %v87, 4294901760
    %640 = vmatmul.f32.gmra.mxu0 %v639
    %v641 = vpop.f32.mrf.mxu0
    %v642 = vadd.f32 %v617, %v641
    %643 = vdwg.mxu0
    %644 = vmatpush.msra.mxu0 0.0
    %645 = vmatpush.msra.mxu0 0.0
    %646 = vmatpush.msra.mxu0 0.0
    %647 = vmatpush.msra.mxu0 0.0
    %648 = vmatpush.msra.mxu0 0.0
    %649 = vmatpush.msra.mxu0 0.0
    %650 = vmatpush.msra.mxu0 0.0
    %651 = vmatpush.msra.mxu0 0.0
    %652 = vmatpush.msra.mxu0 0.0
    %653 = vmatpush.msra.mxu0 0.0
    %654 = vmatpush.msra.mxu0 0.0
    %655 = vmatpush.msra.mxu0 0.0
    %v656 = vand.u32 %v74, 4294901760
    %657 = vmatpush.msra.mxu0 %v656
    %v658 = vand.u32 %v70, 4294901760
    %659 = vmatpush.msra.mxu0 %v658
    %v660 = vand.u32 %v66, 4294901760
    %661 = vmatpush.msra.mxu0 %v660
    %v662 = vand.u32 %v62, 4294901760
    %663 = vmatpush.msra.mxu0 %v662
    %v664 = vand.u32 %v87, 4294901760
    %v665 = vsub.f32 %v87, %v664
    %v666 = vand.u32 %v665, 4294901760
    %v667 = vsub.f32 %v665, %v666
    %v668 = vand.u32 %v667, 4294901760
    %669 = vmatmul.f32.gmra.mxu0 %v668
    %v670 = vpop.f32.mrf.mxu0
    %v671 = vadd.f32 %v80, %v670
    %672 = vdwg.mxu0
    %673 = vmatpush.msra.mxu0 0.0
    %674 = vmatpush.msra.mxu0 0.0
    %675 = vmatpush.msra.mxu0 0.0
    %676 = vmatpush.msra.mxu0 0.0
    %677 = vmatpush.msra.mxu0 0.0
    %678 = vmatpush.msra.mxu0 0.0
    %679 = vmatpush.msra.mxu0 0.0
    %680 = vmatpush.msra.mxu0 0.0
    %681 = vmatpush.msra.mxu0 0.0
    %682 = vmatpush.msra.mxu0 0.0
    %683 = vmatpush.msra.mxu0 0.0
    %684 = vmatpush.msra.mxu0 0.0
    %v685 = vand.u32 %v74, 4294901760
    %v686 = vsub.f32 %v74, %v685
    %v687 = vand.u32 %v686, 4294901760
    %v688 = vsub.f32 %v686, %v687
    %v689 = vand.u32 %v688, 4294901760
    %690 = vmatpush.msra.mxu0 %v689
    %v691 = vand.u32 %v70, 4294901760
    %v692 = vsub.f32 %v70, %v691
    %v693 = vand.u32 %v692, 4294901760
    %v694 = vsub.f32 %v692, %v693
    %v695 = vand.u32 %v694, 4294901760
    %696 = vmatpush.msra.mxu0 %v695
    %v697 = vand.u32 %v66, 4294901760
    %v698 = vsub.f32 %v66, %v697
    %v699 = vand.u32 %v698, 4294901760
    %v700 = vsub.f32 %v698, %v699
    %v701 = vand.u32 %v700, 4294901760
    %702 = vmatpush.msra.mxu0 %v701
    %v703 = vand.u32 %v62, 4294901760
    %v704 = vsub.f32 %v62, %v703
    %v705 = vand.u32 %v704, 4294901760
    %v706 = vsub.f32 %v704, %v705
    %v707 = vand.u32 %v706, 4294901760
    %708 = vmatpush.msra.mxu0 %v707
    %v709 = vand.u32 %v87, 4294901760
    %710 = vmatmul.f32.gmra.mxu0 %v709
    %v711 = vpop.f32.mrf.mxu0
    %v712 = vadd.f32 %v671, %v711
    %713 = vdwg.mxu0
    %714 = vmatpush.msra.mxu0 0.0
    %715 = vmatpush.msra.mxu0 0.0
    %716 = vmatpush.msra.mxu0 0.0
    %717 = vmatpush.msra.mxu0 0.0
    %718 = vmatpush.msra.mxu0 0.0
    %719 = vmatpush.msra.mxu0 0.0
    %720 = vmatpush.msra.mxu0 0.0
    %721 = vmatpush.msra.mxu0 0.0
    %722 = vmatpush.msra.mxu0 0.0
    %723 = vmatpush.msra.mxu0 0.0
    %724 = vmatpush.msra.mxu0 0.0
    %725 = vmatpush.msra.mxu0 0.0
    %v726 = vand.u32 %v74, 4294901760
    %v727 = vsub.f32 %v74, %v726
    %728 = vmatpush.msra.mxu0 %v727
    %v729 = vand.u32 %v70, 4294901760
    %v730 = vsub.f32 %v70, %v729
    %731 = vmatpush.msra.mxu0 %v730
    %v732 = vand.u32 %v66, 4294901760
    %v733 = vsub.f32 %v66, %v732
    %734 = vmatpush.msra.mxu0 %v733
    %v735 = vand.u32 %v62, 4294901760
    %v736 = vsub.f32 %v62, %v735
    %737 = vmatpush.msra.mxu0 %v736
    %v738 = vand.u32 %v87, 4294901760
    %v739 = vsub.f32 %v87, %v738
    %740 = vmatmul.f32.gmra.mxu0 %v739
    %v741 = vpop.f32.mrf.mxu0
    %v742 = vadd.f32 %v712, %v741
    %743 = vdwg.mxu0
    %744 = vmatpush.msra.mxu0 0.0
    %745 = vmatpush.msra.mxu0 0.0
    %746 = vmatpush.msra.mxu0 0.0
    %747 = vmatpush.msra.mxu0 0.0
    %748 = vmatpush.msra.mxu0 0.0
    %749 = vmatpush.msra.mxu0 0.0
    %750 = vmatpush.msra.mxu0 0.0
    %751 = vmatpush.msra.mxu0 0.0
    %752 = vmatpush.msra.mxu0 0.0
    %753 = vmatpush.msra.mxu0 0.0
    %754 = vmatpush.msra.mxu0 0.0
    %755 = vmatpush.msra.mxu0 0.0
    %v756 = vand.u32 %v74, 4294901760
    %757 = vmatpush.msra.mxu0 %v756
    %v758 = vand.u32 %v70, 4294901760
    %759 = vmatpush.msra.mxu0 %v758
    %v760 = vand.u32 %v66, 4294901760
    %761 = vmatpush.msra.mxu0 %v760
    %v762 = vand.u32 %v62, 4294901760
    %763 = vmatpush.msra.mxu0 %v762
    %v764 = vand.u32 %v87, 4294901760
    %v765 = vsub.f32 %v87, %v764
    %v766 = vand.u32 %v765, 4294901760
    %767 = vmatmul.f32.gmra.mxu0 %v766
    %v768 = vpop.f32.mrf.mxu0
    %v769 = vadd.f32 %v742, %v768
    %770 = vdwg.mxu0
    %771 = vmatpush.msra.mxu0 0.0
    %772 = vmatpush.msra.mxu0 0.0
    %773 = vmatpush.msra.mxu0 0.0
    %774 = vmatpush.msra.mxu0 0.0
    %775 = vmatpush.msra.mxu0 0.0
    %776 = vmatpush.msra.mxu0 0.0
    %777 = vmatpush.msra.mxu0 0.0
    %778 = vmatpush.msra.mxu0 0.0
    %779 = vmatpush.msra.mxu0 0.0
    %780 = vmatpush.msra.mxu0 0.0
    %781 = vmatpush.msra.mxu0 0.0
    %782 = vmatpush.msra.mxu0 0.0
    %v783 = vand.u32 %v74, 4294901760
    %v784 = vsub.f32 %v74, %v783
    %v785 = vand.u32 %v784, 4294901760
    %786 = vmatpush.msra.mxu0 %v785
    %v787 = vand.u32 %v70, 4294901760
    %v788 = vsub.f32 %v70, %v787
    %v789 = vand.u32 %v788, 4294901760
    %790 = vmatpush.msra.mxu0 %v789
    %v791 = vand.u32 %v66, 4294901760
    %v792 = vsub.f32 %v66, %v791
    %v793 = vand.u32 %v792, 4294901760
    %794 = vmatpush.msra.mxu0 %v793
    %v795 = vand.u32 %v62, 4294901760
    %v796 = vsub.f32 %v62, %v795
    %v797 = vand.u32 %v796, 4294901760
    %798 = vmatpush.msra.mxu0 %v797
    %v799 = vand.u32 %v87, 4294901760
    %800 = vmatmul.f32.gmra.mxu0 %v799
    %v801 = vpop.f32.mrf.mxu0
    %v802 = vadd.f32 %v769, %v801
    %803 = vdwg.mxu0
    %804 = vmatpush.msra.mxu0 0.0
    %805 = vmatpush.msra.mxu0 0.0
    %806 = vmatpush.msra.mxu0 0.0
    %807 = vmatpush.msra.mxu0 0.0
    %808 = vmatpush.msra.mxu0 0.0
    %809 = vmatpush.msra.mxu0 0.0
    %810 = vmatpush.msra.mxu0 0.0
    %811 = vmatpush.msra.mxu0 0.0
    %812 = vmatpush.msra.mxu0 0.0
    %813 = vmatpush.msra.mxu0 0.0
    %814 = vmatpush.msra.mxu0 0.0
    %815 = vmatpush.msra.mxu0 0.0
    %v816 = vand.u32 %v74, 4294901760
    %817 = vmatpush.msra.mxu0 %v816
    %v818 = vand.u32 %v70, 4294901760
    %819 = vmatpush.msra.mxu0 %v818
    %v820 = vand.u32 %v66, 4294901760
    %821 = vmatpush.msra.mxu0 %v820
    %v822 = vand.u32 %v62, 4294901760
    %823 = vmatpush.msra.mxu0 %v822
    %v824 = vand.u32 %v87, 4294901760
    %825 = vmatmul.f32.gmra.mxu0 %v824
    %v826 = vpop.f32.mrf.mxu0
    %v827 = vadd.f32 %v802, %v826
    %828 = vdwg.mxu0
    %v829 = vand.u32 2147483647, %v272
    %vm830 = vcmp.le.f32.partialorder %v829, 0.7853982
    %vm831 = vcmp.lt.s32.totalorder %v272, 0
    %v832 = vand.u32 %v272, 2139095040
    %v833 = vshrl.u32 %v832, 23
    %v834 = vsub.s32 %v833, 127
    %v835 = vand.u32 2147483647, %v272
    %v836 = vand.u32 %v835, 8388607
    %v837 = vor.u32 %v836, 8388608
    %v838 = vsub.s32 0, %v837
    %v839 = vadd.s32 %v834, 1
    %vm840 = vcmp.gt.s32.totalorder %v839, 0
    %v841 = vsel %vm840, %v839, 0
    %v842 = vshrl.u32 %v841, 5
    %v843 = vand.u32 %v841, 31
    %v844 = vsub.s32 32, %v843
    %v845 = vshrl.u32 683565275, %v844
    %v846 = vshll.u32 683565275, %v843
    %v847 = vshrl.u32 2475754826, %v844
    %v848 = vor.u32 %v846, %v847
    %v849 = vshll.u32 2475754826, %v843
    %v850 = vshrl.u32 2131351028, %v844
    %v851 = vor.u32 %v849, %v850
    %v852 = vshll.u32 2131351028, %v843
    %v853 = vshrl.u32 2102212464, %v844
    %v854 = vor.u32 %v852, %v853
    %v855 = vshll.u32 2102212464, %v843
    %v856 = vshrl.u32 920167782, %v844
    %v857 = vor.u32 %v855, %v856
    %v858 = vshll.u32 920167782, %v843
    %v859 = vshrl.u32 1326507024, %v844
    %v860 = vor.u32 %v858, %v859
    %vm861 = vcmp.lt.s32.totalorder %v842, 1
    %vm862 = vcmp.lt.s32.totalorder %v842, 2
    %vm863 = vcmp.lt.s32.totalorder %v842, 3
    %vm864 = vcmp.lt.s32.totalorder %v842, 4
    %v865 = vsel %vm861, %v845, %v848
    %v866 = vsel %vm864, %v854, 2102212464
    %v867 = vsel %vm863, %v851, %v866
    %v868 = vsel %vm862, %v865, %v867
    %v869 = vsel %vm861, %v848, %v851
    %v870 = vsel %vm864, %v857, 920167782
    %v871 = vsel %vm863, %v854, %v870
    %v872 = vsel %vm862, %v869, %v871
    %v873 = vsel %vm861, %v851, %v854
    %v874 = vsel %vm864, %v860, 1326507024
    %v875 = vsel %vm863, %v857, %v874
    %v876 = vsel %vm862, %v873, %v875
    %v877 = vshll.u32 %v837, 8
    %v878 = vand.u32 %v877, 65535
    %v879 = vshrl.u32 %v877, 16
    %v880 = vand.u32 %v876, 65535
    %v881 = vshrl.u32 %v876, 16
    %v882 = vmul.u32 %v878, %v880
    %v883 = vmul.u32 %v878, %v881
    %v884 = vmul.u32 %v879, %v880
    %v885 = vmul.u32 %v879, %v881
    %v886 = vshll.u32 %v883, 16
    %v887 = vshrl.u32 %v883, 16
    %v888 = vshll.u32 %v884, 16
    %v889 = vshrl.u32 %v884, 16
    %vm890 = vc.u32 %v882, %v886
    %v891 = vsel %vm890, 1, 0
    %v892 = vadd.s32 %v882, %v886
    %v893 = vadd.s32 %v885, %v891
    %vm894 = vc.u32 %v892, %v888
    %v895 = vsel %vm894, 1, 0
    %v896 = vadd.s32 %v892, %v888
    %v897 = vadd.s32 %v893, %v895
    %v898 = vadd.s32 %v897, %v887
    %v899 = vadd.s32 %v898, %v889
    %v900 = vand.u32 %v877, 65535
    %v901 = vshrl.u32 %v877, 16
    %v902 = vand.u32 %v872, 65535
    %v903 = vshrl.u32 %v872, 16
    %v904 = vmul.u32 %v900, %v902
    %v905 = vmul.u32 %v900, %v903
    %v906 = vmul.u32 %v901, %v902
    %v907 = vmul.u32 %v901, %v903
    %v908 = vshll.u32 %v905, 16
    %v909 = vshrl.u32 %v905, 16
    %v910 = vshll.u32 %v906, 16
    %v911 = vshrl.u32 %v906, 16
    %vm912 = vc.u32 %v904, %v908
    %v913 = vsel %vm912, 1, 0
    %v914 = vadd.s32 %v904, %v908
    %v915 = vadd.s32 %v907, %v913
    %vm916 = vc.u32 %v914, %v910
    %v917 = vsel %vm916, 1, 0
    %v918 = vadd.s32 %v914, %v910
    %v919 = vadd.s32 %v915, %v917
    %v920 = vadd.s32 %v919, %v909
    %v921 = vadd.s32 %v920, %v911
    %v922 = vmul.u32 %v877, %v868
    %v923 = vadd.s32 %v899, %v918
    %vm924 = vc.u32 %v899, %v918
    %v925 = vadd.s32 %v921, 1
    %v926 = vsel %vm924, %v925, %v921
    %v927 = vadd.s32 %v922, %v926
    %v928 = vadd.s32 %v927, 536870912
    %v929 = vshrl.u32 %v928, 30
    %v930 = vshll.u32 %v929, 30
    %v931 = vsub.s32 %v927, %v930
    %vm932 = vcmp.lt.s32.totalorder %v931, 0
    %v933 = vsub.s32 0, %v931
    %v934 = vsel %vm932, %v933, %v931
    %v935 = vclz %v934
    %v936 = vsub.s32 %v935, 2
    %vm937 = vcmp.gt.s32.totalorder 0, %v936
    %v938 = vsel %vm937, 0, %v936
    %v939 = vsub.s32 32, %v938
    %v940 = vshll.u32 %v931, %v938
    %v941 = vshrl.u32 %v923, %v939
    %v942 = vor.u32 %v940, %v941
    %v943 = vsub.s32 4294967266, %v938
    %v944 = vadd.s32 %v943, 127
    %v945 = vshll.u32 %v944, 23
    %v946 = vor.u32 4788187, %v945
    %v947 = vand.u32 2147483647, %v946
    %v949 = vcvt.s32.f32 %v942
    %v950 = vmul.f32 %v949, %v947
    %v951 = vxor.u32 %v950, 2147483648
    %v952 = vsel %vm831, %v951, %v950
    %v953 = vsub.s32 4, %v929
    %v954 = vsel %vm831, %v953, %v929
    %v955 = vsel %vm830, %v272, %v952
    %v956 = vsel %vm830, 0, %v954
    %v957 = vmul.f32 %v955, %v955
    %v958 = vmul.f32 %v957, -0.001358992
    %v959 = vadd.f32 %v958, 0.041655596
    %v960 = vmul.f32 %v957, %v959
    %v961 = vadd.f32 %v960, -0.4999988
    %v962 = vmul.f32 %v957, %v961
    %v963 = vadd.f32 1.0, %v962
    %v964 = vmul.f32 %v955, %v955
    %v965 = vmul.f32 %v964, -0.00019511016
    %v966 = vadd.f32 %v965, 0.008332121
    %v967 = vmul.f32 %v964, %v966
    %v968 = vadd.f32 %v967, -0.16666654
    %v969 = vmul.f32 %v964, %v968
    %v970 = vadd.f32 %v969, 1.0
    %v971 = vmul.f32 %v970, %v955
    %vm972 = vweird.f32 %v272
    %v973 = vand.u32 %v956, 3
    %vm974 = vcmp.lt.s32.totalorder %v973, 2
    %vm975 = vcmp.eq.s32.totalorder %v973, 0
    %v976 = vxor.u32 %v971, 2147483648
    %v977 = vsel %vm975, %v963, %v976
    %vm978 = vcmp.eq.s32.totalorder %v973, 2
    %v979 = vxor.u32 %v963, 2147483648
    %v980 = vsel %vm978, %v979, %v971
    %v981 = vsel %vm974, %v977, %v980
    %v982 = vsel %vm972, nan, %v981
    %v983 = vand.u32 2147483647, %v457
    %vm984 = vcmp.le.f32.partialorder %v983, 0.7853982
    %vm985 = vcmp.lt.s32.totalorder %v457, 0
    %v986 = vand.u32 %v457, 2139095040
    %v987 = vshrl.u32 %v986, 23
    %v988 = vsub.s32 %v987, 127
    %v989 = vand.u32 2147483647, %v457
    %v990 = vand.u32 %v989, 8388607
    %v991 = vor.u32 %v990, 8388608
    %v992 = vsub.s32 0, %v991
    %v993 = vadd.s32 %v988, 1
    %vm994 = vcmp.gt.s32.totalorder %v993, 0
    %v995 = vsel %vm994, %v993, 0
    %v996 = vshrl.u32 %v995, 5
    %v997 = vand.u32 %v995, 31
    %v998 = vsub.s32 32, %v997
    %v999 = vshrl.u32 683565275, %v998
    %v1000 = vshll.u32 683565275, %v997
    %v1001 = vshrl.u32 2475754826, %v998
    %v1002 = vor.u32 %v1000, %v1001
    %v1003 = vshll.u32 2475754826, %v997
    %v1004 = vshrl.u32 2131351028, %v998
    %v1005 = vor.u32 %v1003, %v1004
    %v1006 = vshll.u32 2131351028, %v997
    %v1007 = vshrl.u32 2102212464, %v998
    %v1008 = vor.u32 %v1006, %v1007
    %v1009 = vshll.u32 2102212464, %v997
    %v1010 = vshrl.u32 920167782, %v998
    %v1011 = vor.u32 %v1009, %v1010
    %v1012 = vshll.u32 920167782, %v997
    %v1013 = vshrl.u32 1326507024, %v998
    %v1014 = vor.u32 %v1012, %v1013
    %vm1015 = vcmp.lt.s32.totalorder %v996, 1
    %vm1016 = vcmp.lt.s32.totalorder %v996, 2
    %vm1017 = vcmp.lt.s32.totalorder %v996, 3
    %vm1018 = vcmp.lt.s32.totalorder %v996, 4
    %v1019 = vsel %vm1015, %v999, %v1002
    %v1020 = vsel %vm1018, %v1008, 2102212464
    %v1021 = vsel %vm1017, %v1005, %v1020
    %v1022 = vsel %vm1016, %v1019, %v1021
    %v1023 = vsel %vm1015, %v1002, %v1005
    %v1024 = vsel %vm1018, %v1011, 920167782
    %v1025 = vsel %vm1017, %v1008, %v1024
    %v1026 = vsel %vm1016, %v1023, %v1025
    %v1027 = vsel %vm1015, %v1005, %v1008
    %v1028 = vsel %vm1018, %v1014, 1326507024
    %v1029 = vsel %vm1017, %v1011, %v1028
    %v1030 = vsel %vm1016, %v1027, %v1029
    %v1031 = vshll.u32 %v991, 8
    %v1032 = vand.u32 %v1031, 65535
    %v1033 = vshrl.u32 %v1031, 16
    %v1034 = vand.u32 %v1030, 65535
    %v1035 = vshrl.u32 %v1030, 16
    %v1036 = vmul.u32 %v1032, %v1034
    %v1037 = vmul.u32 %v1032, %v1035
    %v1038 = vmul.u32 %v1033, %v1034
    %v1039 = vmul.u32 %v1033, %v1035
    %v1040 = vshll.u32 %v1037, 16
    %v1041 = vshrl.u32 %v1037, 16
    %v1042 = vshll.u32 %v1038, 16
    %v1043 = vshrl.u32 %v1038, 16
    %vm1044 = vc.u32 %v1036, %v1040
    %v1045 = vsel %vm1044, 1, 0
    %v1046 = vadd.s32 %v1036, %v1040
    %v1047 = vadd.s32 %v1039, %v1045
    %vm1048 = vc.u32 %v1046, %v1042
    %v1049 = vsel %vm1048, 1, 0
    %v1050 = vadd.s32 %v1046, %v1042
    %v1051 = vadd.s32 %v1047, %v1049
    %v1052 = vadd.s32 %v1051, %v1041
    %v1053 = vadd.s32 %v1052, %v1043
    %v1054 = vand.u32 %v1031, 65535
    %v1055 = vshrl.u32 %v1031, 16
    %v1056 = vand.u32 %v1026, 65535
    %v1057 = vshrl.u32 %v1026, 16
    %v1058 = vmul.u32 %v1054, %v1056
    %v1059 = vmul.u32 %v1054, %v1057
    %v1060 = vmul.u32 %v1055, %v1056
    %v1061 = vmul.u32 %v1055, %v1057
    %v1062 = vshll.u32 %v1059, 16
    %v1063 = vshrl.u32 %v1059, 16
    %v1064 = vshll.u32 %v1060, 16
    %v1065 = vshrl.u32 %v1060, 16
    %vm1066 = vc.u32 %v1058, %v1062
    %v1067 = vsel %vm1066, 1, 0
    %v1068 = vadd.s32 %v1058, %v1062
    %v1069 = vadd.s32 %v1061, %v1067
    %vm1070 = vc.u32 %v1068, %v1064
    %v1071 = vsel %vm1070, 1, 0
    %v1072 = vadd.s32 %v1068, %v1064
    %v1073 = vadd.s32 %v1069, %v1071
    %v1074 = vadd.s32 %v1073, %v1063
    %v1075 = vadd.s32 %v1074, %v1065
    %v1076 = vmul.u32 %v1031, %v1022
    %v1077 = vadd.s32 %v1053, %v1072
    %vm1078 = vc.u32 %v1053, %v1072
    %v1079 = vadd.s32 %v1075, 1
    %v1080 = vsel %vm1078, %v1079, %v1075
    %v1081 = vadd.s32 %v1076, %v1080
    %v1082 = vadd.s32 %v1081, 536870912
    %v1083 = vshrl.u32 %v1082, 30
    %v1084 = vshll.u32 %v1083, 30
    %v1085 = vsub.s32 %v1081, %v1084
    %vm1086 = vcmp.lt.s32.totalorder %v1085, 0
    %v1087 = vsub.s32 0, %v1085
    %v1088 = vsel %vm1086, %v1087, %v1085
    %v1089 = vclz %v1088
    %v1090 = vsub.s32 %v1089, 2
    %vm1091 = vcmp.gt.s32.totalorder 0, %v1090
    %v1092 = vsel %vm1091, 0, %v1090
    %v1093 = vsub.s32 32, %v1092
    %v1094 = vshll.u32 %v1085, %v1092
    %v1095 = vshrl.u32 %v1077, %v1093
    %v1096 = vor.u32 %v1094, %v1095
    %v1097 = vsub.s32 4294967266, %v1092
    %v1098 = vadd.s32 %v1097, 127
    %v1099 = vshll.u32 %v1098, 23
    %v1100 = vor.u32 4788187, %v1099
    %v1101 = vand.u32 2147483647, %v1100
    %v1103 = vcvt.s32.f32 %v1096
    %v1104 = vmul.f32 %v1103, %v1101
    %v1105 = vxor.u32 %v1104, 2147483648
    %v1106 = vsel %vm985, %v1105, %v1104
    %v1107 = vsub.s32 4, %v1083
    %v1108 = vsel %vm985, %v1107, %v1083
    %v1109 = vsel %vm984, %v457, %v1106
    %v1110 = vsel %vm984, 0, %v1108
    %v1111 = vmul.f32 %v1109, %v1109
    %v1112 = vmul.f32 %v1111, -0.001358992
    %v1113 = vadd.f32 %v1112, 0.041655596
    %v1114 = vmul.f32 %v1111, %v1113
    %v1115 = vadd.f32 %v1114, -0.4999988
    %v1116 = vmul.f32 %v1111, %v1115
    %v1117 = vadd.f32 1.0, %v1116
    %v1118 = vmul.f32 %v1109, %v1109
    %v1119 = vmul.f32 %v1118, -0.00019511016
    %v1120 = vadd.f32 %v1119, 0.008332121
    %v1121 = vmul.f32 %v1118, %v1120
    %v1122 = vadd.f32 %v1121, -0.16666654
    %v1123 = vmul.f32 %v1118, %v1122
    %v1124 = vadd.f32 %v1123, 1.0
    %v1125 = vmul.f32 %v1124, %v1109
    %vm1126 = vweird.f32 %v457
    %v1127 = vand.u32 %v1110, 3
    %vm1128 = vcmp.lt.s32.totalorder %v1127, 2
    %vm1129 = vcmp.eq.s32.totalorder %v1127, 0
    %v1130 = vxor.u32 %v1125, 2147483648
    %v1131 = vsel %vm1129, %v1117, %v1130
    %vm1132 = vcmp.eq.s32.totalorder %v1127, 2
    %v1133 = vxor.u32 %v1117, 2147483648
    %v1134 = vsel %vm1132, %v1133, %v1125
    %v1135 = vsel %vm1128, %v1131, %v1134
    %v1136 = vsel %vm1126, nan, %v1135
    %v1137 = vand.u32 2147483647, %v642
    %vm1138 = vcmp.le.f32.partialorder %v1137, 0.7853982
    %vm1139 = vcmp.lt.s32.totalorder %v642, 0
    %v1140 = vand.u32 %v642, 2139095040
    %v1141 = vshrl.u32 %v1140, 23
    %v1142 = vsub.s32 %v1141, 127
    %v1143 = vand.u32 2147483647, %v642
    %v1144 = vand.u32 %v1143, 8388607
    %v1145 = vor.u32 %v1144, 8388608
    %v1146 = vsub.s32 0, %v1145
    %v1147 = vadd.s32 %v1142, 1
    %vm1148 = vcmp.gt.s32.totalorder %v1147, 0
    %v1149 = vsel %vm1148, %v1147, 0
    %v1150 = vshrl.u32 %v1149, 5
    %v1151 = vand.u32 %v1149, 31
    %v1152 = vsub.s32 32, %v1151
    %v1153 = vshrl.u32 683565275, %v1152
    %v1154 = vshll.u32 683565275, %v1151
    %v1155 = vshrl.u32 2475754826, %v1152
    %v1156 = vor.u32 %v1154, %v1155
    %v1157 = vshll.u32 2475754826, %v1151
    %v1158 = vshrl.u32 2131351028, %v1152
    %v1159 = vor.u32 %v1157, %v1158
    %v1160 = vshll.u32 2131351028, %v1151
    %v1161 = vshrl.u32 2102212464, %v1152
    %v1162 = vor.u32 %v1160, %v1161
    %v1163 = vshll.u32 2102212464, %v1151
    %v1164 = vshrl.u32 920167782, %v1152
    %v1165 = vor.u32 %v1163, %v1164
    %v1166 = vshll.u32 920167782, %v1151
    %v1167 = vshrl.u32 1326507024, %v1152
    %v1168 = vor.u32 %v1166, %v1167
    %vm1169 = vcmp.lt.s32.totalorder %v1150, 1
    %vm1170 = vcmp.lt.s32.totalorder %v1150, 2
    %vm1171 = vcmp.lt.s32.totalorder %v1150, 3
    %vm1172 = vcmp.lt.s32.totalorder %v1150, 4
    %v1173 = vsel %vm1169, %v1153, %v1156
    %v1174 = vsel %vm1172, %v1162, 2102212464
    %v1175 = vsel %vm1171, %v1159, %v1174
    %v1176 = vsel %vm1170, %v1173, %v1175
    %v1177 = vsel %vm1169, %v1156, %v1159
    %v1178 = vsel %vm1172, %v1165, 920167782
    %v1179 = vsel %vm1171, %v1162, %v1178
    %v1180 = vsel %vm1170, %v1177, %v1179
    %v1181 = vsel %vm1169, %v1159, %v1162
    %v1182 = vsel %vm1172, %v1168, 1326507024
    %v1183 = vsel %vm1171, %v1165, %v1182
    %v1184 = vsel %vm1170, %v1181, %v1183
    %v1185 = vshll.u32 %v1145, 8
    %v1186 = vand.u32 %v1185, 65535
    %v1187 = vshrl.u32 %v1185, 16
    %v1188 = vand.u32 %v1184, 65535
    %v1189 = vshrl.u32 %v1184, 16
    %v1190 = vmul.u32 %v1186, %v1188
    %v1191 = vmul.u32 %v1186, %v1189
    %v1192 = vmul.u32 %v1187, %v1188
    %v1193 = vmul.u32 %v1187, %v1189
    %v1194 = vshll.u32 %v1191, 16
    %v1195 = vshrl.u32 %v1191, 16
    %v1196 = vshll.u32 %v1192, 16
    %v1197 = vshrl.u32 %v1192, 16
    %vm1198 = vc.u32 %v1190, %v1194
    %v1199 = vsel %vm1198, 1, 0
    %v1200 = vadd.s32 %v1190, %v1194
    %v1201 = vadd.s32 %v1193, %v1199
    %vm1202 = vc.u32 %v1200, %v1196
    %v1203 = vsel %vm1202, 1, 0
    %v1204 = vadd.s32 %v1200, %v1196
    %v1205 = vadd.s32 %v1201, %v1203
    %v1206 = vadd.s32 %v1205, %v1195
    %v1207 = vadd.s32 %v1206, %v1197
    %v1208 = vand.u32 %v1185, 65535
    %v1209 = vshrl.u32 %v1185, 16
    %v1210 = vand.u32 %v1180, 65535
    %v1211 = vshrl.u32 %v1180, 16
    %v1212 = vmul.u32 %v1208, %v1210
    %v1213 = vmul.u32 %v1208, %v1211
    %v1214 = vmul.u32 %v1209, %v1210
    %v1215 = vmul.u32 %v1209, %v1211
    %v1216 = vshll.u32 %v1213, 16
    %v1217 = vshrl.u32 %v1213, 16
    %v1218 = vshll.u32 %v1214, 16
    %v1219 = vshrl.u32 %v1214, 16
    %vm1220 = vc.u32 %v1212, %v1216
    %v1221 = vsel %vm1220, 1, 0
    %v1222 = vadd.s32 %v1212, %v1216
    %v1223 = vadd.s32 %v1215, %v1221
    %vm1224 = vc.u32 %v1222, %v1218
    %v1225 = vsel %vm1224, 1, 0
    %v1226 = vadd.s32 %v1222, %v1218
    %v1227 = vadd.s32 %v1223, %v1225
    %v1228 = vadd.s32 %v1227, %v1217
    %v1229 = vadd.s32 %v1228, %v1219
    %v1230 = vmul.u32 %v1185, %v1176
    %v1231 = vadd.s32 %v1207, %v1226
    %vm1232 = vc.u32 %v1207, %v1226
    %v1233 = vadd.s32 %v1229, 1
    %v1234 = vsel %vm1232, %v1233, %v1229
    %v1235 = vadd.s32 %v1230, %v1234
    %v1236 = vadd.s32 %v1235, 536870912
    %v1237 = vshrl.u32 %v1236, 30
    %v1238 = vshll.u32 %v1237, 30
    %v1239 = vsub.s32 %v1235, %v1238
    %vm1240 = vcmp.lt.s32.totalorder %v1239, 0
    %v1241 = vsub.s32 0, %v1239
    %v1242 = vsel %vm1240, %v1241, %v1239
    %v1243 = vclz %v1242
    %v1244 = vsub.s32 %v1243, 2
    %vm1245 = vcmp.gt.s32.totalorder 0, %v1244
    %v1246 = vsel %vm1245, 0, %v1244
    %v1247 = vsub.s32 32, %v1246
    %v1248 = vshll.u32 %v1239, %v1246
    %v1249 = vshrl.u32 %v1231, %v1247
    %v1250 = vor.u32 %v1248, %v1249
    %v1251 = vsub.s32 4294967266, %v1246
    %v1252 = vadd.s32 %v1251, 127
    %v1253 = vshll.u32 %v1252, 23
    %v1254 = vor.u32 4788187, %v1253
    %v1255 = vand.u32 2147483647, %v1254
    %v1257 = vcvt.s32.f32 %v1250
    %v1258 = vmul.f32 %v1257, %v1255
    %v1259 = vxor.u32 %v1258, 2147483648
    %v1260 = vsel %vm1139, %v1259, %v1258
    %v1261 = vsub.s32 4, %v1237
    %v1262 = vsel %vm1139, %v1261, %v1237
    %v1263 = vsel %vm1138, %v642, %v1260
    %v1264 = vsel %vm1138, 0, %v1262
    %v1265 = vmul.f32 %v1263, %v1263
    %v1266 = vmul.f32 %v1265, -0.001358992
    %v1267 = vadd.f32 %v1266, 0.041655596
    %v1268 = vmul.f32 %v1265, %v1267
    %v1269 = vadd.f32 %v1268, -0.4999988
    %v1270 = vmul.f32 %v1265, %v1269
    %v1271 = vadd.f32 1.0, %v1270
    %v1272 = vmul.f32 %v1263, %v1263
    %v1273 = vmul.f32 %v1272, -0.00019511016
    %v1274 = vadd.f32 %v1273, 0.008332121
    %v1275 = vmul.f32 %v1272, %v1274
    %v1276 = vadd.f32 %v1275, -0.16666654
    %v1277 = vmul.f32 %v1272, %v1276
    %v1278 = vadd.f32 %v1277, 1.0
    %v1279 = vmul.f32 %v1278, %v1263
    %vm1280 = vweird.f32 %v642
    %v1281 = vand.u32 %v1264, 3
    %vm1282 = vcmp.lt.s32.totalorder %v1281, 2
    %vm1283 = vcmp.eq.s32.totalorder %v1281, 0
    %v1284 = vxor.u32 %v1279, 2147483648
    %v1285 = vsel %vm1283, %v1271, %v1284
    %vm1286 = vcmp.eq.s32.totalorder %v1281, 2
    %v1287 = vxor.u32 %v1271, 2147483648
    %v1288 = vsel %vm1286, %v1287, %v1279
    %v1289 = vsel %vm1282, %v1285, %v1288
    %v1290 = vsel %vm1280, nan, %v1289
    %v1291 = vand.u32 2147483647, %v827
    %vm1292 = vcmp.le.f32.partialorder %v1291, 0.7853982
    %vm1293 = vcmp.lt.s32.totalorder %v827, 0
    %v1294 = vand.u32 %v827, 2139095040
    %v1295 = vshrl.u32 %v1294, 23
    %v1296 = vsub.s32 %v1295, 127
    %v1297 = vand.u32 2147483647, %v827
    %v1298 = vand.u32 %v1297, 8388607
    %v1299 = vor.u32 %v1298, 8388608
    %v1300 = vsub.s32 0, %v1299
    %v1301 = vadd.s32 %v1296, 1
    %vm1302 = vcmp.gt.s32.totalorder %v1301, 0
    %v1303 = vsel %vm1302, %v1301, 0
    %v1304 = vshrl.u32 %v1303, 5
    %v1305 = vand.u32 %v1303, 31
    %v1306 = vsub.s32 32, %v1305
    %v1307 = vshrl.u32 683565275, %v1306
    %v1308 = vshll.u32 683565275, %v1305
    %v1309 = vshrl.u32 2475754826, %v1306
    %v1310 = vor.u32 %v1308, %v1309
    %v1311 = vshll.u32 2475754826, %v1305
    %v1312 = vshrl.u32 2131351028, %v1306
    %v1313 = vor.u32 %v1311, %v1312
    %v1314 = vshll.u32 2131351028, %v1305
    %v1315 = vshrl.u32 2102212464, %v1306
    %v1316 = vor.u32 %v1314, %v1315
    %v1317 = vshll.u32 2102212464, %v1305
    %v1318 = vshrl.u32 920167782, %v1306
    %v1319 = vor.u32 %v1317, %v1318
    %v1320 = vshll.u32 920167782, %v1305
    %v1321 = vshrl.u32 1326507024, %v1306
    %v1322 = vor.u32 %v1320, %v1321
    %vm1323 = vcmp.lt.s32.totalorder %v1304, 1
    %vm1324 = vcmp.lt.s32.totalorder %v1304, 2
    %vm1325 = vcmp.lt.s32.totalorder %v1304, 3
    %vm1326 = vcmp.lt.s32.totalorder %v1304, 4
    %v1327 = vsel %vm1323, %v1307, %v1310
    %v1328 = vsel %vm1326, %v1316, 2102212464
    %v1329 = vsel %vm1325, %v1313, %v1328
    %v1330 = vsel %vm1324, %v1327, %v1329
    %v1331 = vsel %vm1323, %v1310, %v1313
    %v1332 = vsel %vm1326, %v1319, 920167782
    %v1333 = vsel %vm1325, %v1316, %v1332
    %v1334 = vsel %vm1324, %v1331, %v1333
    %v1335 = vsel %vm1323, %v1313, %v1316
    %v1336 = vsel %vm1326, %v1322, 1326507024
    %v1337 = vsel %vm1325, %v1319, %v1336
    %v1338 = vsel %vm1324, %v1335, %v1337
    %v1339 = vshll.u32 %v1299, 8
    %v1340 = vand.u32 %v1339, 65535
    %v1341 = vshrl.u32 %v1339, 16
    %v1342 = vand.u32 %v1338, 65535
    %v1343 = vshrl.u32 %v1338, 16
    %v1344 = vmul.u32 %v1340, %v1342
    %v1345 = vmul.u32 %v1340, %v1343
    %v1346 = vmul.u32 %v1341, %v1342
    %v1347 = vmul.u32 %v1341, %v1343
    %v1348 = vshll.u32 %v1345, 16
    %v1349 = vshrl.u32 %v1345, 16
    %v1350 = vshll.u32 %v1346, 16
    %v1351 = vshrl.u32 %v1346, 16
    %vm1352 = vc.u32 %v1344, %v1348
    %v1353 = vsel %vm1352, 1, 0
    %v1354 = vadd.s32 %v1344, %v1348
    %v1355 = vadd.s32 %v1347, %v1353
    %vm1356 = vc.u32 %v1354, %v1350
    %v1357 = vsel %vm1356, 1, 0
    %v1358 = vadd.s32 %v1354, %v1350
    %v1359 = vadd.s32 %v1355, %v1357
    %v1360 = vadd.s32 %v1359, %v1349
    %v1361 = vadd.s32 %v1360, %v1351
    %v1362 = vand.u32 %v1339, 65535
    %v1363 = vshrl.u32 %v1339, 16
    %v1364 = vand.u32 %v1334, 65535
    %v1365 = vshrl.u32 %v1334, 16
    %v1366 = vmul.u32 %v1362, %v1364
    %v1367 = vmul.u32 %v1362, %v1365
    %v1368 = vmul.u32 %v1363, %v1364
    %v1369 = vmul.u32 %v1363, %v1365
    %v1370 = vshll.u32 %v1367, 16
    %v1371 = vshrl.u32 %v1367, 16
    %v1372 = vshll.u32 %v1368, 16
    %v1373 = vshrl.u32 %v1368, 16
    %vm1374 = vc.u32 %v1366, %v1370
    %v1375 = vsel %vm1374, 1, 0
    %v1376 = vadd.s32 %v1366, %v1370
    %v1377 = vadd.s32 %v1369, %v1375
    %vm1378 = vc.u32 %v1376, %v1372
    %v1379 = vsel %vm1378, 1, 0
    %v1380 = vadd.s32 %v1376, %v1372
    %v1381 = vadd.s32 %v1377, %v1379
    %v1382 = vadd.s32 %v1381, %v1371
    %v1383 = vadd.s32 %v1382, %v1373
    %v1384 = vmul.u32 %v1339, %v1330
    %v1385 = vadd.s32 %v1361, %v1380
    %vm1386 = vc.u32 %v1361, %v1380
    %v1387 = vadd.s32 %v1383, 1
    %v1388 = vsel %vm1386, %v1387, %v1383
    %v1389 = vadd.s32 %v1384, %v1388
    %v1390 = vadd.s32 %v1389, 536870912
    %v1391 = vshrl.u32 %v1390, 30
    %v1392 = vshll.u32 %v1391, 30
    %v1393 = vsub.s32 %v1389, %v1392
    %vm1394 = vcmp.lt.s32.totalorder %v1393, 0
    %v1395 = vsub.s32 0, %v1393
    %v1396 = vsel %vm1394, %v1395, %v1393
    %v1397 = vclz %v1396
    %v1398 = vsub.s32 %v1397, 2
    %vm1399 = vcmp.gt.s32.totalorder 0, %v1398
    %v1400 = vsel %vm1399, 0, %v1398
    %v1401 = vsub.s32 32, %v1400
    %v1402 = vshll.u32 %v1393, %v1400
    %v1403 = vshrl.u32 %v1385, %v1401
    %v1404 = vor.u32 %v1402, %v1403
    %v1405 = vsub.s32 4294967266, %v1400
    %v1406 = vadd.s32 %v1405, 127
    %v1407 = vshll.u32 %v1406, 23
    %v1408 = vor.u32 4788187, %v1407
    %v1409 = vand.u32 2147483647, %v1408
    %v1411 = vcvt.s32.f32 %v1404
    %v1412 = vmul.f32 %v1411, %v1409
    %v1413 = vxor.u32 %v1412, 2147483648
    %v1414 = vsel %vm1293, %v1413, %v1412
    %v1415 = vsub.s32 4, %v1391
    %v1416 = vsel %vm1293, %v1415, %v1391
    %v1417 = vsel %vm1292, %v827, %v1414
    %v1418 = vsel %vm1292, 0, %v1416
    %v1419 = vmul.f32 %v1417, %v1417
    %v1420 = vmul.f32 %v1419, -0.001358992
    %v1421 = vadd.f32 %v1420, 0.041655596
    %v1422 = vmul.f32 %v1419, %v1421
    %v1423 = vadd.f32 %v1422, -0.4999988
    %v1424 = vmul.f32 %v1419, %v1423
    %v1425 = vadd.f32 1.0, %v1424
    %v1426 = vmul.f32 %v1417, %v1417
    %v1427 = vmul.f32 %v1426, -0.00019511016
    %v1428 = vadd.f32 %v1427, 0.008332121
    %v1429 = vmul.f32 %v1426, %v1428
    %v1430 = vadd.f32 %v1429, -0.16666654
    %v1431 = vmul.f32 %v1426, %v1430
    %v1432 = vadd.f32 %v1431, 1.0
    %v1433 = vmul.f32 %v1432, %v1417
    %vm1434 = vweird.f32 %v827
    %v1435 = vand.u32 %v1418, 3
    %vm1436 = vcmp.lt.s32.totalorder %v1435, 2
    %vm1437 = vcmp.eq.s32.totalorder %v1435, 0
    %v1438 = vxor.u32 %v1433, 2147483648
    %v1439 = vsel %vm1437, %v1425, %v1438
    %vm1440 = vcmp.eq.s32.totalorder %v1435, 2
    %v1441 = vxor.u32 %v1425, 2147483648
    %v1442 = vsel %vm1440, %v1441, %v1433
    %v1443 = vsel %vm1436, %v1439, %v1442
    %v1444 = vsel %vm1434, nan, %v1443
    %v1449 = vrot.slane %v1136, 6
    %v1450 = vrot.slane %v1290, 4
    %v1451 = vrot.slane %v1444, 2
    %vm1452 = vcmask 1041408
    %v1453 = vsel %vm1452, %v982, %v1449
    %vm1454 = vcmask 1045508
    %v1455 = vsel %vm1454, %v1450, %v1451
    %vm1456 = vcmask 1043456
    %v1457 = vsel %vm1456, %v1453, %v1455
    %1459 = vst [vmem:[#allocation8] sm:$0xff] %v1457
    // Predicated region
    $region26: #{tpu_custom_call.1} parent=1 // pred_check
      _
    $region27: #{tpu_custom_call.1} parent=1 // pred_check_branch
      %1461 = sbr.rel (0) target = $region29
    $region28: #{tpu_custom_call.1} parent=1 // pred_region
      %1463 = vsyncadd [#allocation4], 0
      %s1465 = sshll.u32 [#allocation8], 4
      %s1466 = int_to_ptr.vmem [resolvable:$true] %s1465
      %s1467 = sshll.u32 %s3, 4
      %s1468 = int_to_ptr.hbm [resolvable:$true] %s1467
      %1470 = dma.vmem_to_hbm [thread:$0]  %s1466, 128, %s1468, [#allocation4]
    $region29: #{tpu_custom_call.1} parent=1 // pred_fallthru
      _
    // Predicated region
    $region30: #{tpu_custom_call.1} parent=1 // pred_check
      _
    $region31: #{tpu_custom_call.1} parent=1 // pred_check_branch
      %1472 = sbr.rel (0) target = $region33
    $region32: #{tpu_custom_call.1} parent=1 // pred_region
      %1474 = dma.done [#allocation4], 128
    $region33: #{tpu_custom_call.1} parent=1 // pred_fallthru
      _
    %1475 = vsyncpa [#allocation3], 1
    %1476 = vsyncpa [#allocation6], 1
    %1477 = vsyncpa [#allocation4], 1

</llo_original>
